<compile_context>
chip_gen: v6e
topology: v6e:2x2x1
jax: 0.10.0
libtpu: 0.0.40
codegen_flags: <defaults>
</compile_context>

<pallas_src>
import jax
import jax.numpy as jnp
from jax.experimental import pallas as pl
from jax.experimental.pallas import tpu as pltpu

_LANES = 128


def _split_tanh_kernel(p_ref, x_ref, o_ref):
    # p_ref is a (3,) f32 array in SMEM: [c, a, lamb].
    c = p_ref[0]
    a = p_ref[1]
    lamb = p_ref[2]
    # Load in the source dtype, upcast to f32 for compute only.
    x = x_ref[...].astype(jnp.float32)
    # tanh -> EUP, muls/adds -> VPU.
    y = x + c * jnp.tanh(lamb * (x - a))
    o_ref[...] = y.astype(o_ref.dtype)


def split_tanh(x, c, a, lamb, *, tile_rows=2048):
    """Applies x + c * tanh(lamb * (x - a)) elementwise via a Pallas TPU kernel.

    c, a, lamb are shape-(1,) parameters (as in the PyTorch module).
    I/O is in x.dtype; arithmetic is done in float32 inside the kernel.
    """
    orig_shape = x.shape
    dtype = x.dtype
    n = x.size

    # Flatten (free reshape, no HBM copy for contiguous layouts).
    flat = x.reshape(-1)

    # Pad only if needed to reach a 128-lane multiple (rare; tail is sliced off).
    rem = n % _LANES
    padded_n = n if rem == 0 else n + (_LANES - rem)
    if padded_n != n:
        flat = jnp.pad(flat, (0, padded_n - n))

    rows = padded_n // _LANES
    x2d = flat.reshape(rows, _LANES)

    # Block rows: big tiles for bandwidth; tile_rows (default 2048) is a
    # multiple of 8 (and 16, for 16-bit dtypes). If the whole array is smaller
    # than one tile, use the full row extent (full-dim blocks are always legal).
    tr = tile_rows if rows > tile_rows else rows
    grid = (pl.cdiv(rows, tr),)

    params = jnp.concatenate(
        [c.reshape(-1), a.reshape(-1), lamb.reshape(-1)]
    ).astype(jnp.float32)

    out2d = pl.pallas_call(
        _split_tanh_kernel,
        out_shape=jax.ShapeDtypeStruct((rows, _LANES), dtype),
        grid=grid,
        in_specs=[
            pl.BlockSpec(memory_space=pltpu.SMEM),          # [c, a, lamb]
            pl.BlockSpec((tr, _LANES), lambda i: (i, 0)),   # x tile
        ],
        out_specs=pl.BlockSpec((tr, _LANES), lambda i: (i, 0)),
        compiler_params=pltpu.CompilerParams(
            dimension_semantics=("parallel",)
        ),
    )(params, x2d)

    out = out2d.reshape(-1)
    if padded_n != n:
        out = out[:n]
    return out.reshape(orig_shape)


if __name__ == "__main__":
    key = jax.random.PRNGKey(0)
    kx, kc, ka = jax.random.split(key, 3)

    # Small NCHW input, matching the PyTorch module's typical usage.
    x = jax.random.normal(kx, (2, 4, 16, 16), dtype=jnp.float32)

    # Deterministic parameter init mirroring __init__:
    #   c ~ U[0,1) (torch.rand(1)), a ~ N(0,1) (torch.randn(1)), lamb = 10.0
    c = jax.random.uniform(kc, (1,), dtype=jnp.float32)
    a = jax.random.normal(ka, (1,), dtype=jnp.float32)
    lamb = jnp.array([10.0], dtype=jnp.float32)

    out = split_tanh(x, c, a, lamb)
    jax.block_until_ready(out)

    # Sanity check against plain-JAX reference.
    ref = x + c[0] * jnp.tanh(lamb[0] * (x - a[0]))
    assert out.shape == x.shape
    assert out.dtype == x.dtype
    assert jnp.allclose(out, ref, atol=1e-5, rtol=1e-5)

    print("KERNEL_OK")
</pallas_src>

<mosaic_0001>
module attributes {stable_mosaic.version = 11 : i64} {
  func.func @_split_tanh_kernel(%arg0: i32, %arg1: memref<3xf32, #tpu.memory_space<smem>>, %arg2: memref<16x128xf32, #tpu.memory_space<vmem>>, %arg3: memref<16x128xf32, #tpu.memory_space<vmem>>) attributes {dimension_semantics = [#tpu.dimension_semantics<parallel>], iteration_bounds = array<i64: 1>, scalar_prefetch = 0 : i64, scratch_operands = 0 : i64, tpu.core_type = #tpu.core_type<tc>, window_params = [{transform_indices = @transform_0, window_bounds = array<i64: 3>}, {transform_indices = @transform_1, window_bounds = array<i64: 16, 128>}, {transform_indices = @transform_2, window_bounds = array<i64: 16, 128>}]} {
    %c0 = arith.constant 0 : index
    %0 = memref.load %arg1[%c0] : memref<3xf32, #tpu.memory_space<smem>>
    %c1 = arith.constant 1 : index
    %1 = memref.load %arg1[%c1] : memref<3xf32, #tpu.memory_space<smem>>
    %c2 = arith.constant 2 : index
    %2 = memref.load %arg1[%c2] : memref<3xf32, #tpu.memory_space<smem>>
    %c0_0 = arith.constant 0 : index
    %c0_1 = arith.constant 0 : index
    %3 = vector.load %arg2[%c0_0, %c0_1] : memref<16x128xf32, #tpu.memory_space<vmem>>, vector<16x128xf32>
    %4 = vector.broadcast %1 : f32 to vector<16x128xf32>
    %5 = arith.subf %3, %4 : vector<16x128xf32>
    %6 = vector.broadcast %2 : f32 to vector<16x128xf32>
    %7 = arith.mulf %6, %5 : vector<16x128xf32>
    %8 = math.tanh %7 : vector<16x128xf32>
    %9 = vector.broadcast %0 : f32 to vector<16x128xf32>
    %10 = arith.mulf %9, %8 : vector<16x128xf32>
    %11 = arith.addf %3, %10 : vector<16x128xf32>
    %c0_2 = arith.constant 0 : index
    %c0_3 = arith.constant 0 : index
    %12 = vector.load %arg3[%c0_2, %c0_3] : memref<16x128xf32, #tpu.memory_space<vmem>>, vector<16x128xf32>
    tpu.vector_store %arg3[%c0_2, %c0_3], %11 {strides = array<i32>} : memref<16x128xf32, #tpu.memory_space<vmem>>, vector<16x128xf32>,
    return
  }
  func.func @transform_0(%arg0: i32) -> i32 {
    %c0_i32 = arith.constant 0 : i32
    %c0_i32_0 = arith.constant 0 : i32
    return %c0_i32 : i32
  }
  func.func @transform_1(%arg0: i32) -> (i32, i32) {
    %c0_i32 = arith.constant 0 : i32
    %c0_i32_0 = arith.constant 0 : i32
    return %arg0, %c0_i32 : i32, i32
  }
  func.func @transform_2(%arg0: i32) -> (i32, i32) {
    %c0_i32 = arith.constant 0 : i32
    %c0_i32_0 = arith.constant 0 : i32
    return %arg0, %c0_i32 : i32, i32
  }
}

</mosaic_0001>

<llo_original>
// kernel: tpu_custom_call.1
$region0: #{tpu_custom_call.1}
  #allocation0 [shape = 'u32[]', space=smem, size = 0x4, offset = 0x4, fixed_abs, tag = 'smem constant byte address 0x4 - core index']
  #allocation1 [shape = 'u32[144,128]{1,0:T(1,128)}', space=vmem, size = 0x12000, scoped, tag = 'internal scratch']
  %s0 = inlined_call_operand.hbm [shape: f32[3], index: 0, kind: input, shape index: {}]
  %s1 = inlined_call_operand.hbm [shape: f32[16,128], index: 1, kind: input, shape index: {}]
  %s2 = inlined_call_operand.hbm [shape: f32[16,128], index: 2, kind: output, shape index: {}]
  %s3 = sld [smem:[#allocation0]]
  $region26: #{tpu_custom_call.1} parent=0
    _
  %s5 = ssub.s32 1, %s3
  %s6 = scalar_select 0, %s5, %s3
  $region1: #{tpu_custom_call.1} parent=0
    #allocation2 [shape = 'u8[512]{0}', space=smem, size = 0x200, scoped, tag = 'input window, operand 0, single buffered']
    #allocation3 [shape = 's32[1]{0}', space=sflag, size = 0x4, scoped, tag = 'scoped memory for tpu_custom_call.1']
    #allocation4 [shape = 's32[1]{0}', space=sflag, size = 0x4, scoped, tag = 'scoped memory for tpu_custom_call.1']
    #allocation5 [shape = 's32[1]{0}', space=sflag, size = 0x4, scoped, tag = 'scoped memory for tpu_custom_call.1']
    #allocation6 [shape = 'u8[8192]{0}', space=vmem, size = 0x2000, scoped, tag = 'input window, operand 1, single buffered']
    #allocation7 [shape = 'u8[8192]{0}', space=vmem, size = 0x2000, scoped, tag = 'output window, operand 0, single buffered']
    %7 = vsyncpa [#allocation5], 0
    %8 = vsyncpa [#allocation3], 0
    %9 = vsyncpa [#allocation4], 0
    // Predicated region
    $region2: #{tpu_custom_call.1} parent=1 // pred_check
      _
    $region3: #{tpu_custom_call.1} parent=1 // pred_check_branch
      %11 = sbr.rel (0) target = $region5
    $region4: #{tpu_custom_call.1} parent=1 // pred_region
      %s13 = ssub.s32 16, 16
      %14 = vsyncadd [#allocation5], %s13
      %17 = dma.hbm_to_smem %s0, 16, [#allocation2], [#allocation5]
    $region5: #{tpu_custom_call.1} parent=1 // pred_fallthru
      _
    // Predicated region
    $region6: #{tpu_custom_call.1} parent=1 // pred_check
      _
    $region7: #{tpu_custom_call.1} parent=1 // pred_check_branch
      %19 = sbr.rel (0) target = $region9
    $region8: #{tpu_custom_call.1} parent=1 // pred_region
      %s21 = ssub.s32 256, 256
      %22 = vsyncadd [#allocation3], %s21
      %s23 = sshll.u32 [#allocation6], 4
      %s24 = int_to_ptr.vmem [resolvable:$true] %s23
      %29 = dma.hbm_to_vmem [thread:$0]  %s1, 256, %s24, [#allocation3], 128, 128, 8
    $region9: #{tpu_custom_call.1} parent=1 // pred_fallthru
      _
    // Predicated region
    $region10: #{tpu_custom_call.1} parent=1 // pred_check
      _
    $region11: #{tpu_custom_call.1} parent=1 // pred_check_branch
      %31 = sbr.rel (0) target = $region13
    $region12: #{tpu_custom_call.1} parent=1 // pred_region
      %32 = dma.done [#allocation5], 16
    $region13: #{tpu_custom_call.1} parent=1 // pred_fallthru
      _
    // Predicated region
    $region14: #{tpu_custom_call.1} parent=1 // pred_check
      _
    $region15: #{tpu_custom_call.1} parent=1 // pred_check_branch
      %34 = sbr.rel (0) target = $region17
    $region16: #{tpu_custom_call.1} parent=1 // pred_region
      %35 = dma.done [#allocation3], 256
    $region17: #{tpu_custom_call.1} parent=1 // pred_fallthru
      _
    %36 = sfence
    %s37 = sld [smem:[#allocation2]]
    %s38 = sld [smem:[#allocation2 + $0x1]]
    %s39 = sld [smem:[#allocation2 + $0x2]]
    %v40 = vld [vmem:[#allocation6] sm:$0xff]
    %v41 = vld [vmem:[#allocation6 + $0x8] sm:$0xff]
    %v42 = vstv %s38
    %v43 = vsub.f32 %v40, %v42
    %v44 = vsub.f32 %v41, %v42
    %v45 = vstv %s39
    %v46 = vmul.f32 %v45, %v43
    %v47 = vmul.f32 %v45, %v44
    %v48 = vtanh.pop %v46
    %v49 = vtanh.pop %v47
    %v50 = vstv %s37
    %v51 = vmul.f32 %v50, %v48
    %v52 = vmul.f32 %v50, %v49
    %v53 = vadd.f32 %v40, %v51
    %v54 = vadd.f32 %v41, %v52
    %55 = vst [vmem:[#allocation7] sm:$0xff] %v53
    %56 = vst [vmem:[#allocation7 + $0x8] sm:$0xff] %v54
    // Predicated region
    $region18: #{tpu_custom_call.1} parent=1 // pred_check
      _
    $region19: #{tpu_custom_call.1} parent=1 // pred_check_branch
      %58 = sbr.rel (0) target = $region21
    $region20: #{tpu_custom_call.1} parent=1 // pred_region
      %s60 = ssub.s32 256, 256
      %61 = vsyncadd [#allocation4], %s60
      %s62 = sshll.u32 [#allocation7], 4
      %s63 = int_to_ptr.vmem [resolvable:$true] %s62
      %68 = dma.vmem_to_hbm [thread:$0]  %s63, 256, %s2, [#allocation4], 128, 128, 8
    $region21: #{tpu_custom_call.1} parent=1 // pred_fallthru
      _
    // Predicated region
    $region22: #{tpu_custom_call.1} parent=1 // pred_check
      _
    $region23: #{tpu_custom_call.1} parent=1 // pred_check_branch
      %70 = sbr.rel (0) target = $region25
    $region24: #{tpu_custom_call.1} parent=1 // pred_region
      %71 = dma.done [#allocation4], 256
    $region25: #{tpu_custom_call.1} parent=1 // pred_fallthru
      _
    %72 = vsyncpa [#allocation3], 1
    %73 = vsyncpa [#allocation4], 1
    %74 = vsyncpa [#allocation5], 1

</llo_original>
